<compile_context>
chip_gen: v6e
topology: v6e:2x2x1
jax: 0.10.0
libtpu: 0.0.40
codegen_flags: <defaults>
</compile_context>

<pallas_src>
from functools import partial

import jax
import jax.numpy as jnp
from jax import lax
from jax.experimental import pallas as pl
from jax.experimental.pallas import tpu as pltpu


# ----------------------------------------------------------------------------
# Pallas kernel: per-image cosine-vs-GAP score, first-hit argmax / argmin
# ----------------------------------------------------------------------------
def _score_kernel(up_ref, w_ref, idx_ref, ids_ref, *, bt, eps, chunk):
    # up_ref : (bt, L, D)   un-scrambled unfold slab (patch rows, lane axis = D)
    # w_ref  : (bt, D, 1)   gap weights in the module's scrambled pairing (f32)
    # idx/ids_ref : (bt, 1, 128) i32 lane-dense index outputs
    L = up_ref.shape[1]
    D = up_ref.shape[2]
    l_iota = lax.broadcasted_iota(jnp.int32, (L, 1), 0)   # hoisted out of the loop

    for bi in range(bt):                    # bt is small (<= b//2); heavy math below is chunked
        dots = jnp.zeros((L, 1), jnp.float32)
        pn2 = jnp.zeros((L, 1), jnp.float32)
        # Chunk the lane (D) axis: keeps live f32 temporaries to a few vregs and
        # routes the dot product through the otherwise-idle MXU.
        for s in range(0, D, chunk):
            e = min(s + chunk, D)
            blk = up_ref[bi, :, s:e].astype(jnp.float32)          # (L, ce)
            wcol = w_ref[bi, s:e, :]                              # (ce, 1) f32
            dots = dots + jnp.dot(blk, wcol,
                                  preferred_element_type=jnp.float32)
            pn2 = pn2 + jnp.sum(blk * blk, axis=1, keepdims=True)

        # ||gap|| is a common positive factor of every score -> dropped; the eps
        # clamp moves from |p||g| to |p| (f32 path, no flush-to-zero risk).
        score = dots * lax.rsqrt(jnp.maximum(pn2, eps * eps))     # EUP rsqrt

        # First-hit argmax / argmin (torch.topk k=1 semantics).  An all-NaN score
        # vector yields idx = ids = L -> swap silently skipped downstream (torch
        # would propagate the NaN) -- documented deviation.
        mx = jnp.max(score, axis=0, keepdims=True)                # (1, 1)
        mn = jnp.min(score, axis=0, keepdims=True)
        idx = jnp.min(jnp.where(score == mx, l_iota, L), axis=0, keepdims=True)
        ids = jnp.min(jnp.where(score == mn, l_iota, L), axis=0, keepdims=True)

        idx_ref[bi] = jnp.broadcast_to(idx, (1, 128))
        ids_ref[bi] = jnp.broadcast_to(ids, (1, 128))


# ----------------------------------------------------------------------------
# Plain-JAX glue: unfold / fold (stride == kernel_size, no overlap)
# ----------------------------------------------------------------------------
def unfold_nchw(x, k):
    """F.unfold(x, kernel_size=k, stride=k): (b, c*k*k, L), channel-major."""
    b, c, H, W = x.shape
    nH = (H - k) // k + 1
    nW = (W - k) // k + 1
    xc = x[:, :, :nH * k, :nW * k]
    xr = xc.reshape(b, c, nH, k, nW, k)
    u = xr.transpose(0, 1, 3, 5, 2, 4).reshape(b, c * k * k, nH * nW)
    return u, nH, nW


def fold_nchw(u, k, H, W, nH, nW):
    """F.fold(..., output_size=(H, W), kernel_size=k, stride=k), no overlap."""
    b = u.shape[0]
    c = u.shape[1] // (k * k)
    xr = u.reshape(b, c, k, k, nH, nW).transpose(0, 1, 4, 2, 5, 3)
    out = xr.reshape(b, c, nH * k, nW * k)
    return jnp.pad(out, ((0, 0), (0, 0), (0, H - nH * k), (0, W - nW * k)))


# ----------------------------------------------------------------------------
# Forward pass
# ----------------------------------------------------------------------------
def patch_easre_forward(x, H, W, patch_ratio):
    b, c, _, _ = x.shape
    k = min(int(H * patch_ratio) + 1, int(W * patch_ratio) + 1)
    kk = k * k
    nH = (H - k) // k + 1
    nW = (W - k) // k + 1
    L = nH * nW
    D = c * kk

    # Un-scrambled unfold, directly in (b, L, D) patch-row layout:
    # up[b, l, ch*kk + kp] == F.unfold(x)[b, ch*kk + kp, l].
    xc = x[:, :, :nH * k, :nW * k]
    up = xc.reshape(b, c, nH, k, nW, k).transpose(0, 2, 4, 1, 3, 5).reshape(b, L, D)

    # GAP weights in the module's scrambled pairing: the reshape(b, kk, c, L)
    # scramble pairs unfold element d with gap[d % c]  ->  w = tile(gap, kk).
    gap = jnp.mean(x.astype(jnp.float32), axis=(2, 3))            # (b, c)
    w = jnp.tile(gap, (1, kk))[:, :, None]                        # (b, D, 1) f32

    # Batch-block selection: biggest divisor of b whose slab stays <= 6 MiB
    # (double-buffered ~12 MiB), but never more than b//2 so the grid keeps at
    # least 2 steps (v7x megacore on the "parallel" batch axis).
    slab_bytes = L * D * x.dtype.itemsize
    max_bt = b if b == 1 else max(1, b // 2)
    bt = 1
    for cand in range(max_bt, 0, -1):
        if b % cand == 0 and cand * slab_bytes <= 6 * 1024 * 1024:
            bt = cand
            break
    # TODO(synk): for extremely large L*D slabs (> ~30 MiB) an additional L-tiling
    # of the reduction would be needed; not required at detection-typical shapes.
    vmem_limit = int(min(max(32 * 1024 * 1024, 2 * bt * slab_bytes + (2 << 20)),
                         64 * 1024 * 1024))

    # Lane-chunk size: multiple of 128, sized so the per-chunk f32 temp ~<=256 KiB.
    chunk = min(D, max(128, ((65536 // max(L, 1)) // 128) * 128))

    idx_o, ids_o = pl.pallas_call(
        partial(_score_kernel, bt=bt, eps=1e-8, chunk=chunk),
        out_shape=(jax.ShapeDtypeStruct((b, 1, 128), jnp.int32),
                   jax.ShapeDtypeStruct((b, 1, 128), jnp.int32)),
        grid_spec=pltpu.PrefetchScalarGridSpec(
            num_scalar_prefetch=0,
            grid=(b // bt,),
            in_specs=[
                pl.BlockSpec((bt, L, D), lambda i: (i, 0, 0)),
                pl.BlockSpec((bt, D, 1), lambda i: (i, 0, 0)),
            ],
            out_specs=[
                pl.BlockSpec((bt, 1, 128), lambda i: (i, 0, 0)),
                pl.BlockSpec((bt, 1, 128), lambda i: (i, 0, 0)),
            ],
        ),
        compiler_params=pltpu.CompilerParams(
            dimension_semantics=("parallel",),     # batch axis -> v7x megacore
            vmem_limit_bytes=vmem_limit),
    )(up, w)

    idx = idx_o[:, 0, 0]                                          # (b,) i32
    ids = ids_o[:, 0, 0]                                          # (b,) i32

    # Single-row swap, fused by XLA into the fold pass below (no slab write-back
    # in the kernel).  If idx == L (all-NaN sentinel) no row matches -> no swap.
    src = up[jnp.arange(b), ids][:, None, :]                      # (b, 1, D)
    l_iota = jnp.arange(L, dtype=jnp.int32)[None, :, None]
    up_sw = jnp.where(l_iota == idx[:, None, None], src, up)      # (b, L, D)

    # Apply the module's reshape(b, kk, c, L) scramble, fold, and mask * x.
    # fold_in[b, c'*kk + a, l] = up_sw[b, l, a*c + c']
    fold_in = up_sw.reshape(b, L, kk, c).transpose(0, 3, 2, 1).reshape(b, c * kk, L)
    mask = fold_nchw(fold_in, k, H, W, nH, nW)
    return mask * x


# ----------------------------------------------------------------------------
# Pure-JAX reference (mirrors the PyTorch module) for a sanity check
# ----------------------------------------------------------------------------
def _reference(x, H, W, patch_ratio):
    b, c = x.shape[:2]
    k = min(int(H * patch_ratio) + 1, int(W * patch_ratio) + 1)
    kk = k * k
    u, nH, nW = unfold_nchw(x, k)
    L = nH * nW
    xp = u.reshape(b, kk, c, L).transpose(0, 3, 2, 1)              # (b, L, c, kk)
    gap = jnp.mean(x, axis=(2, 3))                                 # (b, c)
    xg = jnp.broadcast_to(gap[:, None, :, None], xp.shape)
    xgf = xg.reshape(b, L, c * kk)
    xpf = xp.reshape(b, L, c * kk)
    dots = jnp.sum(xgf * xpf, axis=-1)
    cos = dots / jnp.maximum(
        jnp.linalg.norm(xgf, axis=-1) * jnp.linalg.norm(xpf, axis=-1), 1e-8)
    idx = jnp.argmax(cos, axis=-1)
    ids = jnp.argmin(cos, axis=-1)
    rows = xpf[jnp.arange(b), ids]
    xpf = xpf.at[jnp.arange(b), idx].set(rows)
    mask = fold_nchw(xpf.transpose(0, 2, 1), k, H, W, nH, nW)
    return mask * x


if __name__ == "__main__":
    key = jax.random.PRNGKey(0)
    b, c, H, W = 2, 4, 16, 16
    patch_ratio = 0.2                     # patch_size = int(16*0.2)+1 = 4
    x = jax.random.normal(key, (b, c, H, W), dtype=jnp.float32)

    fwd = jax.jit(patch_easre_forward, static_argnums=(1, 2, 3))
    y = fwd(x, H, W, patch_ratio)
    jax.block_until_ready(y)

    y_ref = _reference(x, H, W, patch_ratio)
    assert y.shape == x.shape
    assert jnp.allclose(y, y_ref, atol=1e-5, rtol=1e-5)
    print("KERNEL_OK")
</pallas_src>

<mosaic_0001>
module attributes {stable_mosaic.version = 11 : i64} {
  func.func @_score_kernel(%arg0: i32, %arg1: memref<1x16x64xf32, #tpu.memory_space<vmem>>, %arg2: memref<1x64x1xf32, #tpu.memory_space<vmem>>, %arg3: memref<1x1x128xi32, #tpu.memory_space<vmem>>, %arg4: memref<1x1x128xi32, #tpu.memory_space<vmem>>) attributes {dimension_semantics = [#tpu.dimension_semantics<parallel>], iteration_bounds = array<i64: 2>, scalar_prefetch = 0 : i64, scratch_operands = 0 : i64, tpu.core_type = #tpu.core_type<tc>, window_params = [{transform_indices = @transform_0, window_bounds = array<i64: 1, 16, 64>}, {transform_indices = @transform_1, window_bounds = array<i64: 1, 64, 1>}, {transform_indices = @transform_2, window_bounds = array<i64: 1, 1, 128>}, {transform_indices = @transform_3, window_bounds = array<i64: 1, 1, 128>}]} {
    %0 = tpu.iota {dimensions = array<i32: 0>} : vector<16x1xi32>
    %cst = arith.constant 0.000000e+00 : f32
    %1 = vector.broadcast %cst : f32 to vector<16x1xf32>
    %cst_0 = arith.constant 0.000000e+00 : f32
    %2 = vector.broadcast %cst_0 : f32 to vector<16x1xf32>
    %c0 = arith.constant 0 : index
    %c0_1 = arith.constant 0 : index
    %c0_2 = arith.constant 0 : index
    %3 = vector.load %arg1[%c0, %c0_1, %c0_2] : memref<1x16x64xf32, #tpu.memory_space<vmem>>, vector<1x16x64xf32>
    %4 = vector.shape_cast %3 : vector<1x16x64xf32> to vector<16x64xf32>
    %c0_3 = arith.constant 0 : index
    %c0_4 = arith.constant 0 : index
    %c0_5 = arith.constant 0 : index
    %5 = vector.load %arg2[%c0_3, %c0_4, %c0_5] : memref<1x64x1xf32, #tpu.memory_space<vmem>>, vector<1x64x1xf32>
    %6 = vector.shape_cast %5 : vector<1x64x1xf32> to vector<64x1xf32>
    %cst_6 = arith.constant dense<0.000000e+00> : vector<16x1xf32>
    %7 = tpu.matmul %4, %6, %cst_6 {dimension_numbers = #tpu.dot_dimension_numbers<[1], [0], [0], [1], [0, 0, 1, 1], [], []>} : vector<16x64xf32>, vector<64x1xf32>, vector<16x1xf32> -> vector<16x1xf32>
    %8 = arith.addf %1, %7 : vector<16x1xf32>
    %9 = arith.mulf %4, %4 : vector<16x64xf32>
    %cst_7 = arith.constant dense<0.000000e+00> : vector<16xf32>
    %10 = vector.multi_reduction <add>, %9, %cst_7 [1] : vector<16x64xf32> to vector<16xf32>
    %11 = vector.shape_cast %10 : vector<16xf32> to vector<16x1xf32>
    %12 = arith.addf %2, %11 : vector<16x1xf32>
    %cst_8 = arith.constant 1.000000e-16 : f32
    %13 = vector.broadcast %cst_8 : f32 to vector<16x1xf32>
    %14 = arith.maximumf %12, %13 : vector<16x1xf32>
    %15 = math.rsqrt %14 : vector<16x1xf32>
    %16 = arith.mulf %8, %15 : vector<16x1xf32>
    %cst_9 = arith.constant dense<0xFF800000> : vector<1xf32>
    %17 = vector.multi_reduction <maximumf>, %16, %cst_9 [0] : vector<16x1xf32> to vector<1xf32>
    %18 = vector.shape_cast %17 : vector<1xf32> to vector<1x1xf32>
    %cst_10 = arith.constant dense<0x7F800000> : vector<1xf32>
    %19 = vector.multi_reduction <minimumf>, %16, %cst_10 [0] : vector<16x1xf32> to vector<1xf32>
    %20 = vector.shape_cast %19 : vector<1xf32> to vector<1x1xf32>
    %21 = vector.broadcast %18 : vector<1x1xf32> to vector<16x1xf32>
    %22 = arith.cmpf oeq, %16, %21 : vector<16x1xf32>
    %c16_i32 = arith.constant 16 : i32
    %23 = vector.broadcast %c16_i32 : i32 to vector<16x1xi32>
    %24 = arith.select %22, %0, %23 : vector<16x1xi1>, vector<16x1xi32>
    %cst_11 = arith.constant dense<2147483647> : vector<1xi32>
    %25 = vector.multi_reduction <minsi>, %24, %cst_11 [0] : vector<16x1xi32> to vector<1xi32>
    %26 = vector.shape_cast %25 : vector<1xi32> to vector<1x1xi32>
    %27 = vector.broadcast %20 : vector<1x1xf32> to vector<16x1xf32>
    %28 = arith.cmpf oeq, %16, %27 : vector<16x1xf32>
    %c16_i32_12 = arith.constant 16 : i32
    %29 = vector.broadcast %c16_i32_12 : i32 to vector<16x1xi32>
    %30 = arith.select %28, %0, %29 : vector<16x1xi1>, vector<16x1xi32>
    %cst_13 = arith.constant dense<2147483647> : vector<1xi32>
    %31 = vector.multi_reduction <minsi>, %30, %cst_13 [0] : vector<16x1xi32> to vector<1xi32>
    %32 = vector.shape_cast %31 : vector<1xi32> to vector<1x1xi32>
    %33 = vector.shape_cast %26 : vector<1x1xi32> to vector<1x1xi32>
    %34 = vector.broadcast %33 : vector<1x1xi32> to vector<1x128xi32>
    %c0_14 = arith.constant 0 : index
    %c0_15 = arith.constant 0 : index
    %c0_16 = arith.constant 0 : index
    %35 = vector.load %arg3[%c0_14, %c0_15, %c0_16] : memref<1x1x128xi32, #tpu.memory_space<vmem>>, vector<1x1x128xi32>
    %36 = vector.shape_cast %35 : vector<1x1x128xi32> to vector<1x128xi32>
    %37 = vector.shape_cast %34 : vector<1x128xi32> to vector<1x1x128xi32>
    tpu.vector_store %arg3[%c0_14, %c0_15, %c0_16], %37 {strides = array<i32>} : memref<1x1x128xi32, #tpu.memory_space<vmem>>, vector<1x1x128xi32>,
    %38 = vector.shape_cast %32 : vector<1x1xi32> to vector<1x1xi32>
    %39 = vector.broadcast %38 : vector<1x1xi32> to vector<1x128xi32>
    %c0_17 = arith.constant 0 : index
    %c0_18 = arith.constant 0 : index
    %c0_19 = arith.constant 0 : index
    %40 = vector.load %arg4[%c0_17, %c0_18, %c0_19] : memref<1x1x128xi32, #tpu.memory_space<vmem>>, vector<1x1x128xi32>
    %41 = vector.shape_cast %40 : vector<1x1x128xi32> to vector<1x128xi32>
    %42 = vector.shape_cast %39 : vector<1x128xi32> to vector<1x1x128xi32>
    tpu.vector_store %arg4[%c0_17, %c0_18, %c0_19], %42 {strides = array<i32>} : memref<1x1x128xi32, #tpu.memory_space<vmem>>, vector<1x1x128xi32>,
    return
  }
  func.func @transform_0(%arg0: i32) -> (i32, i32, i32) {
    %c0_i32 = arith.constant 0 : i32
    %c0_i32_0 = arith.constant 0 : i32
    %c0_i32_1 = arith.constant 0 : i32
    return %arg0, %c0_i32, %c0_i32_0 : i32, i32, i32
  }
  func.func @transform_1(%arg0: i32) -> (i32, i32, i32) {
    %c0_i32 = arith.constant 0 : i32
    %c0_i32_0 = arith.constant 0 : i32
    %c0_i32_1 = arith.constant 0 : i32
    return %arg0, %c0_i32, %c0_i32_0 : i32, i32, i32
  }
  func.func @transform_2(%arg0: i32) -> (i32, i32, i32) {
    %c0_i32 = arith.constant 0 : i32
    %c0_i32_0 = arith.constant 0 : i32
    %c0_i32_1 = arith.constant 0 : i32
    return %arg0, %c0_i32, %c0_i32_0 : i32, i32, i32
  }
  func.func @transform_3(%arg0: i32) -> (i32, i32, i32) {
    %c0_i32 = arith.constant 0 : i32
    %c0_i32_0 = arith.constant 0 : i32
    %c0_i32_1 = arith.constant 0 : i32
    return %arg0, %c0_i32, %c0_i32_0 : i32, i32, i32
  }
}

</mosaic_0001>

<llo_original>
// kernel: patch_easre_forward.1
$region0: #{patch_easre_forward.1}
  #allocation0 [shape = 'u32[]', space=smem, size = 0x4, offset = 0x4, fixed_abs, tag = 'smem constant byte address 0x4 - core index']
  #allocation1 [shape = 'u32[144,128]{1,0:T(1,128)}', space=vmem, size = 0x12000, scoped, tag = 'internal scratch']
  %s0 = inlined_call_operand.vmem [shape: f32[2,16,64], index: 0, kind: input, shape index: {}]
  %s1 = inlined_call_operand.vmem [shape: f32[2,64,1], index: 1, kind: input, shape index: {}]
  %s2 = inlined_call_operand.vmem [shape: s32[2,1,128], index: 2, kind: output, shape index: {0}]
  %s3 = inlined_call_operand.vmem [shape: s32[2,1,128], index: 3, kind: output, shape index: {1}]
  %4 = xla_tuple %s2, %s3
  %s5 = sld [smem:[#allocation0]]
  $region49: #{patch_easre_forward.1} parent=0
    _
  %s7 = ssub.s32 1, %s5
  %s8 = scalar_select 0, %s7, %s5
  loop: start=0, step=1, limit=4
  $region2: #{patch_easre_forward.1} parent=0 // loop_pre_header
    _
  $region3: #{patch_easre_forward.1} parent=0 // loop_header
    %s10 = sphi 0, %s14
    %p11 = scmp.ge.s32.totalorder %s10, 4
    %s20 = sphi 0, %s22
    %s23 = sphi 0, %s20
    %s24 = sphi 0, %s23
    %s40 = sphi 0, %s24
    %s46 = sphi 0, %s48
    %s49 = sphi 0, %s46
    %s50 = sphi 0, %s49
    %s66 = sphi 0, %s50
    %s72 = sphi 0, %s74
    %s75 = sphi 0, %s72
    %s76 = sphi 0, %s75
    %s92 = sphi 0, %s76
    %s98 = sphi 0, %s100
    %s101 = sphi 0, %s98
    %s102 = sphi 0, %s101
    %s118 = sphi 0, %s102
  $region4: #{patch_easre_forward.1} parent=0 // loop_header_branch
    %13 = sbr.rel (%p11) target = $region8
  $region5: #{patch_easre_forward.1} parent=0 // loop_body
    %s15 = ssub.s32 %s10, 1
    %s16 = ssub.s32 %s10, 2
    %s17 = sadd.s32 %s10, 1
    %s18 = ssub.s32 %s10, %s17
    %p19 = scmp.eq.s32.totalorder %s18, 0
    %s21 = sadd.s32 %s20, 1
    %s22 = scalar_select %p19, %s20, %s21
    %p25 = pneg %p19
    %p26 = scmp.eq.s32.totalorder %s10, 1
    %p27 = por %p25, %p26
    %p28 = scmp.ne.s32.totalorder %s20, %s23
    %p29 = scmp.eq.s32.totalorder %s10, 0
    %p30 = por %p28, %p29
    %p31 = scmp.ne.s32.totalorder %s20, %s23
    %p32 = scmp.eq.s32.totalorder %s15, 1
    %p33 = por %p31, %p32
    %p34 = scmp.ne.s32.totalorder %s23, %s24
    %p35 = scmp.eq.s32.totalorder %s15, 0
    %p36 = por %p34, %p35
    %p37 = scmp.ne.s32.totalorder %s23, %s24
    %p38 = scmp.eq.s32.totalorder %s16, 1
    %p39 = por %p37, %p38
    %p41 = scmp.ne.s32.totalorder %s24, %s40
    %p42 = scmp.eq.s32.totalorder %s16, 0
    %p43 = por %p41, %p42
    %s44 = ssub.s32 %s10, %s17
    %p45 = scmp.eq.s32.totalorder %s44, 0
    %s47 = sadd.s32 %s46, 1
    %s48 = scalar_select %p45, %s46, %s47
    %p51 = pneg %p45
    %p52 = scmp.eq.s32.totalorder %s10, 1
    %p53 = por %p51, %p52
    %p54 = scmp.ne.s32.totalorder %s46, %s49
    %p55 = scmp.eq.s32.totalorder %s10, 0
    %p56 = por %p54, %p55
    %p57 = scmp.ne.s32.totalorder %s46, %s49
    %p58 = scmp.eq.s32.totalorder %s15, 1
    %p59 = por %p57, %p58
    %p60 = scmp.ne.s32.totalorder %s49, %s50
    %p61 = scmp.eq.s32.totalorder %s15, 0
    %p62 = por %p60, %p61
    %p63 = scmp.ne.s32.totalorder %s49, %s50
    %p64 = scmp.eq.s32.totalorder %s16, 1
    %p65 = por %p63, %p64
    %p67 = scmp.ne.s32.totalorder %s50, %s66
    %p68 = scmp.eq.s32.totalorder %s16, 0
    %p69 = por %p67, %p68
    %s70 = ssub.s32 %s10, %s17
    %p71 = scmp.eq.s32.totalorder %s70, 0
    %s73 = sadd.s32 %s72, 1
    %s74 = scalar_select %p71, %s72, %s73
    %p77 = pneg %p71
    %p78 = scmp.eq.s32.totalorder %s10, 1
    %p79 = por %p77, %p78
    %p80 = scmp.ne.s32.totalorder %s72, %s75
    %p81 = scmp.eq.s32.totalorder %s10, 0
    %p82 = por %p80, %p81
    %p83 = scmp.ne.s32.totalorder %s72, %s75
    %p84 = scmp.eq.s32.totalorder %s15, 1
    %p85 = por %p83, %p84
    %p86 = scmp.ne.s32.totalorder %s75, %s76
    %p87 = scmp.eq.s32.totalorder %s15, 0
    %p88 = por %p86, %p87
    %p89 = scmp.ne.s32.totalorder %s75, %s76
    %p90 = scmp.eq.s32.totalorder %s16, 1
    %p91 = por %p89, %p90
    %p93 = scmp.ne.s32.totalorder %s76, %s92
    %p94 = scmp.eq.s32.totalorder %s16, 0
    %p95 = por %p93, %p94
    %s96 = ssub.s32 %s10, %s17
    %p97 = scmp.eq.s32.totalorder %s96, 0
    %s99 = sadd.s32 %s98, 1
    %s100 = scalar_select %p97, %s98, %s99
    %p103 = pneg %p97
    %p104 = scmp.eq.s32.totalorder %s10, 1
    %p105 = por %p103, %p104
    %p106 = scmp.ne.s32.totalorder %s98, %s101
    %p107 = scmp.eq.s32.totalorder %s10, 0
    %p108 = por %p106, %p107
    %p109 = scmp.ne.s32.totalorder %s98, %s101
    %p110 = scmp.eq.s32.totalorder %s15, 1
    %p111 = por %p109, %p110
    %p112 = scmp.ne.s32.totalorder %s101, %s102
    %p113 = scmp.eq.s32.totalorder %s15, 0
    %p114 = por %p112, %p113
    %p115 = scmp.ne.s32.totalorder %s101, %s102
    %p116 = scmp.eq.s32.totalorder %s16, 1
    %p117 = por %p115, %p116
    %p119 = scmp.ne.s32.totalorder %s102, %s118
    %p120 = scmp.eq.s32.totalorder %s16, 0
    %p121 = por %p119, %p120
    %p122 = scmp.le.s32.totalorder 1, %s10
    %p123 = scmp.lt.s32.totalorder %s10, 3
    %p124 = pnand %p122, %p123
    %p125 = pneg %p124
    // Predicated region
    $region9: #{patch_easre_forward.1} parent=5 // pred_check
      _
    $region10: #{patch_easre_forward.1} parent=5 // pred_check_branch
      %127 = sbr.rel (%p124) target = $region12
    $region11: #{patch_easre_forward.1} parent=5 // pred_region
      %s128 = ssub.s32 %s10, 1
    $region12: #{patch_easre_forward.1} parent=5 // pred_fallthru
      _
    %p129 = scmp.lt.s32.totalorder %s10, 2
    // Predicated region
    $region13: #{patch_easre_forward.1} parent=5 // pred_check
      %p130 = pneg %p129
    $region14: #{patch_easre_forward.1} parent=5 // pred_check_branch
      %132 = sbr.rel (%p130) target = $region16
    $region15: #{patch_easre_forward.1} parent=5 // pred_region
      // Predicated region
      $region17: #{patch_easre_forward.1} parent=15 // pred_check
        %p133 = pneg %p30
      $region18: #{patch_easre_forward.1} parent=15 // pred_check_branch
        %135 = sbr.rel (%p133) target = $region20
      $region19: #{patch_easre_forward.1} parent=15 // pred_region
        %p136 = scmp.lt.s32.totalorder %s10, 1
        %s137 = scalar_select %p136, %s10, 1
        %s138 = smul.addr %s137, 2
        %s139 = smul.addr %s138, 8
        %s140 = scalar_lea.vmem %s0, %s139
      $region20: #{patch_easre_forward.1} parent=15 // pred_fallthru
        _
      // Predicated region
      $region21: #{patch_easre_forward.1} parent=15 // pred_check
        %p141 = pneg %p56
      $region22: #{patch_easre_forward.1} parent=15 // pred_check_branch
        %143 = sbr.rel (%p141) target = $region24
      $region23: #{patch_easre_forward.1} parent=15 // pred_region
        %p144 = scmp.lt.s32.totalorder %s10, 1
        %s145 = scalar_select %p144, %s10, 1
        %s146 = smul.addr %s145, 8
        %s147 = smul.addr %s146, 8
        %s148 = scalar_lea.vmem %s1, %s147
      $region24: #{patch_easre_forward.1} parent=15 // pred_fallthru
        _
    $region16: #{patch_easre_forward.1} parent=5 // pred_fallthru
      _
    %p149 = scmp.le.s32.totalorder 1, %s10
    %p150 = scmp.lt.s32.totalorder %s10, 3
    %p151 = pnand %p149, %p150
    %p152 = pneg %p151
    // Predicated region
    $region25: #{patch_easre_forward.1} parent=5 // pred_check
      _
    $region26: #{patch_easre_forward.1} parent=5 // pred_check_branch
      %154 = sbr.rel (%p151) target = $region28
    $region27: #{patch_easre_forward.1} parent=5 // pred_region
      %s155 = ssub.s32 %s10, 1
      %p156 = scmp.lt.s32.totalorder %s15, 1
      %s157 = scalar_select %p156, %s15, 1
      %s158 = smul.addr %s157, 2
      %s159 = smul.addr %s158, 8
      %s160 = scalar_lea.vmem %s0, %s159
      %p161 = pneg %p36
      %p162 = pneg %p33
      %p163 = scmp.lt.s32.totalorder %s15, 1
      %s164 = scalar_select %p163, %s15, 1
      %s165 = smul.addr %s164, 8
      %s166 = smul.addr %s165, 8
      %s167 = scalar_lea.vmem %s1, %s166
      %p168 = pneg %p62
      %p169 = pneg %p59
      %p170 = pneg %p88
      %p171 = pneg %p85
      %p172 = scmp.lt.s32.totalorder %s15, 1
      %s173 = scalar_select %p172, %s15, 1
      %s174 = scalar_lea.vmem %s2, %s173
      %p175 = pneg %p114
      %p176 = pneg %p111
      %p177 = scmp.lt.s32.totalorder %s15, 1
      %s178 = scalar_select %p177, %s15, 1
      %s179 = scalar_lea.vmem %s3, %s178
      %p180 = scmp.lt.s32.totalorder %s15, 1
      %s181 = scalar_select %p180, %s15, 1
      %s182 = smul.addr %s181, 2
      %s183 = smul.addr %s182, 8
      %s184 = scalar_lea.vmem %s0, %s183
      %p185 = scmp.lt.s32.totalorder %s15, 1
      %s186 = scalar_select %p185, %s15, 1
      %s187 = smul.addr %s186, 8
      %s188 = smul.addr %s187, 8
      %s189 = scalar_lea.vmem %s1, %s188
      %p190 = scmp.lt.s32.totalorder %s15, 1
      %s191 = scalar_select %p190, %s15, 1
      %s192 = scalar_lea.vmem %s2, %s191
      %p193 = scmp.lt.s32.totalorder %s15, 1
      %s194 = scalar_select %p193, %s15, 1
      %s195 = scalar_lea.vmem %s3, %s194
      %v196 = vlaneseq
      %v197 = vshrl.u32 %v196, 7
      %v198 = vadd.s32 %v197, 8
      %v199 = vld [vmem:[%s184] sm:$0xff]
      %v200 = vld [vmem:[%s184 + $0x8] sm:$0xff]
      %v201 = vld [vmem:[%s189] sm:$0xff]
      %v202 = vld [vmem:[%s189 + $0x8] sm:$0xff]
      %v203 = vld [vmem:[%s189 + $0x10] sm:$0xff]
      %v204 = vld [vmem:[%s189 + $0x18] sm:$0xff]
      %v205 = vld [vmem:[%s189 + $0x20] sm:$0xff]
      %v206 = vld [vmem:[%s189 + $0x28] sm:$0xff]
      %v207 = vld [vmem:[%s189 + $0x30] sm:$0xff]
      %v208 = vld [vmem:[%s189 + $0x38] sm:$0xff]
      %vm209 = vcmask 523264
      %v211 = vsel %vm209, %v199, 0
      %v214 = vsel %vm209, %v200, 0
      %216 = vmatprep.subr.mxu0 0.0
      %217 = vmatpush1.msra.mxu0 0.0
      %218 = vmatprep.subr.mxu0 0.0
      %219 = vmatpush1.msra.mxu0 0.0
      %220 = vmatprep.subr.mxu0 0.0
      %221 = vmatpush1.msra.mxu0 0.0
      %222 = vmatprep.subr.mxu0 0.0
      %223 = vmatpush1.msra.mxu0 0.0
      %224 = vmatprep.subr.mxu0 0.0
      %225 = vmatpush1.msra.mxu0 0.0
      %226 = vmatprep.subr.mxu0 0.0
      %227 = vmatpush1.msra.mxu0 0.0
      %228 = vmatprep.subr.mxu0 0.0
      %229 = vmatpush1.msra.mxu0 0.0
      %230 = vmatprep.subr.mxu0 0.0
      %231 = vmatpush1.msra.mxu0 0.0
      %232 = vmatprep.subr.mxu0 0.0
      %233 = vmatpush1.msra.mxu0 %v208
      %234 = vmatprep.subr.mxu0 0.0
      %235 = vmatpush1.msra.mxu0 %v207
      %236 = vmatprep.subr.mxu0 0.0
      %237 = vmatpush1.msra.mxu0 %v206
      %238 = vmatprep.subr.mxu0 0.0
      %239 = vmatpush1.msra.mxu0 %v205
      %240 = vmatprep.subr.mxu0 0.0
      %241 = vmatpush1.msra.mxu0 %v204
      %242 = vmatprep.subr.mxu0 0.0
      %243 = vmatpush1.msra.mxu0 %v203
      %244 = vmatprep.subr.mxu0 0.0
      %245 = vmatpush1.msra.mxu0 %v202
      %246 = vmatprep.subr.mxu0 0.0
      %247 = vmatpush1.msra.mxu0 %v201
      %248 = vmatprep.subr.mxu0 0.0
      %249 = vmatpush2.msra.mxu0 0.0
      %250 = vmatprep.subr.mxu0 0.0
      %251 = vmatpush2.msra.mxu0 0.0
      %252 = vmatprep.subr.mxu0 0.0
      %253 = vmatpush2.msra.mxu0 0.0
      %254 = vmatprep.subr.mxu0 0.0
      %255 = vmatpush2.msra.mxu0 0.0
      %256 = vmatprep.subr.mxu0 0.0
      %257 = vmatpush2.msra.mxu0 0.0
      %258 = vmatprep.subr.mxu0 0.0
      %259 = vmatpush2.msra.mxu0 0.0
      %260 = vmatprep.subr.mxu0 0.0
      %261 = vmatpush2.msra.mxu0 0.0
      %262 = vmatprep.subr.mxu0 0.0
      %263 = vmatpush2.msra.mxu0 0.0
      %264 = vmatprep.subr.mxu0 0.0
      %265 = vmatpush2.msra.mxu0 0.0
      %266 = vmatprep.subr.mxu0 0.0
      %267 = vmatpush2.msra.mxu0 0.0
      %268 = vmatprep.subr.mxu0 0.0
      %269 = vmatpush2.msra.mxu0 0.0
      %270 = vmatprep.subr.mxu0 0.0
      %271 = vmatpush2.msra.mxu0 0.0
      %272 = vmatprep.subr.mxu0 0.0
      %273 = vmatpush2.msra.mxu0 0.0
      %274 = vmatprep.subr.mxu0 0.0
      %275 = vmatpush2.msra.mxu0 0.0
      %276 = vmatprep.subr.mxu0 0.0
      %277 = vmatpush2.msra.mxu0 0.0
      %278 = vmatprep.subr.mxu0 0.0
      %279 = vmatpush2.msra.mxu0 0.0
      %280 = vmatprep.mubr.f32.mxu0 0.0
      %281 = vmatmul.mubr.f32.gmra.mxu0 %v211
      %v282 = vpop.f32.mrf.mxu0
      %v283 = vadd.f32 0.0, %v282
      %v284 = vpop.f32.mrf.mxu0
      %285 = vmatprep.mubr.f32.mxu0 0.0
      %286 = vmatmul.mubr.f32.gmra.mxu0 %v214
      %v287 = vpop.f32.mrf.mxu0
      %v288 = vadd.f32 0.0, %v287
      %v289 = vpop.f32.mrf.mxu0
      %290 = vdwg.mxu0
      %v291 = vmul.f32 %v199, %v199
      %v292 = vmul.f32 %v200, %v200
      %v293 = vsel %vm209, %v291, 0.0
      %294 = vadd.xlane.f32.xlu0 %v293
      %v295 = vpop.xlane.xlu0 %294
      %v296 = vsel %vm209, %v292, 0.0
      %297 = vadd.xlane.f32.xlu0 %v296
      %v298 = vpop.xlane.xlu0 %297
      %v299 = vadd.f32 %v295, 0.0
      %v300 = vadd.f32 %v298, 0.0
      %v301 = vmax.f32 %v299, 1e-16
      %v302 = vmax.f32 %v300, 1e-16
      %v303 = vrsqrt.pop %v301
      %v304 = vrsqrt.pop %v302
      %v305 = vmul.f32 %v283, %v303
      %v306 = vmul.f32 %v288, %v304
      %vm307 = vcmask 7168
      %v308 = vsel %vm307, %v305, -inf
      %v309 = vsel %vm307, %v306, -inf
      %v310 = vmax.f32 %v308, %v309
      %v311 = vrot.slane %v310, 4
      %v312 = vmax.f32 %v310, %v311
      %v313 = vrot.slane %v312, 2
      %v314 = vmax.f32 %v312, %v313
      %v315 = vrot.slane %v314, 1
      %v316 = vmax.f32 %v314, %v315
      %v317 = vsel %vm307, %v305, inf
      %v318 = vsel %vm307, %v306, inf
      %v319 = vmin.f32 %v317, %v318
      %v320 = vrot.slane %v319, 4
      %v321 = vmin.f32 %v319, %v320
      %v322 = vrot.slane %v321, 2
      %v323 = vmin.f32 %v321, %v322
      %v324 = vrot.slane %v323, 1
      %v325 = vmin.f32 %v323, %v324
      %vm326 = vcmp.eq.f32.partialorder %v305, %v316
      %vm327 = vcmp.eq.f32.partialorder %v306, %v316
      %v328 = vsel %vm326, %v197, 16
      %v329 = vsel %vm327, %v198, 16
      %v330 = vsel %vm307, %v328, 2147483647
      %v331 = vsel %vm307, %v329, 2147483647
      %vm332 = vcmp.lt.s32.totalorder %v330, %v331
      %v333 = vsel %vm332, %v330, %v331
      %v334 = vrot.slane %v333, 4
      %vm335 = vcmp.lt.s32.totalorder %v333, %v334
      %v336 = vsel %vm335, %v333, %v334
      %v337 = vrot.slane %v336, 2
      %vm338 = vcmp.lt.s32.totalorder %v336, %v337
      %v339 = vsel %vm338, %v336, %v337
      %v340 = vrot.slane %v339, 1
      %vm341 = vcmp.lt.s32.totalorder %v339, %v340
      %v342 = vsel %vm341, %v339, %v340
      %vm343 = vcmp.eq.f32.partialorder %v305, %v325
      %vm344 = vcmp.eq.f32.partialorder %v306, %v325
      %v345 = vsel %vm343, %v197, 16
      %v346 = vsel %vm344, %v198, 16
      %v347 = vsel %vm307, %v345, 2147483647
      %v348 = vsel %vm307, %v346, 2147483647
      %vm349 = vcmp.lt.s32.totalorder %v347, %v348
      %v350 = vsel %vm349, %v347, %v348
      %v351 = vrot.slane %v350, 4
      %vm352 = vcmp.lt.s32.totalorder %v350, %v351
      %v353 = vsel %vm352, %v350, %v351
      %v354 = vrot.slane %v353, 2
      %vm355 = vcmp.lt.s32.totalorder %v353, %v354
      %v356 = vsel %vm355, %v353, %v354
      %v357 = vrot.slane %v356, 1
      %vm358 = vcmp.lt.s32.totalorder %v356, %v357
      %v359 = vsel %vm358, %v356, %v357
      %360 = vset.pattern.permute.xlu0 0
      %361 = vperm.xlu0 %360, %v342
      %v362 = vpop.permute.xlu0 %361
      %363 = vst [vmem:[%s192] sm:$0x1] %v362
      %364 = vset.pattern.permute.xlu0 0
      %365 = vperm.xlu0 %364, %v359
      %v366 = vpop.permute.xlu0 %365
      %367 = vst [vmem:[%s195] sm:$0x1] %v366
      %p368 = scmp.lt.s32.totalorder %s15, 1
      %s369 = scalar_select %p368, %s15, 1
      %s370 = scalar_lea.vmem %s2, %s369
      %p371 = scmp.lt.s32.totalorder %s15, 1
      %s372 = scalar_select %p371, %s15, 1
      %s373 = scalar_lea.vmem %s3, %s372
      // Predicated region
      $region29: #{patch_easre_forward.1} parent=27 // pred_check
        %p374 = pneg %p85
      $region30: #{patch_easre_forward.1} parent=27 // pred_check_branch
        %376 = sbr.rel (%p374) target = $region32
      $region31: #{patch_easre_forward.1} parent=27 // pred_region
        _
      $region32: #{patch_easre_forward.1} parent=27 // pred_fallthru
        _
      // Predicated region
      $region33: #{patch_easre_forward.1} parent=27 // pred_check
        %p377 = pneg %p111
      $region34: #{patch_easre_forward.1} parent=27 // pred_check_branch
        %379 = sbr.rel (%p377) target = $region36
      $region35: #{patch_easre_forward.1} parent=27 // pred_region
        _
      $region36: #{patch_easre_forward.1} parent=27 // pred_fallthru
        _
    $region28: #{patch_easre_forward.1} parent=5 // pred_fallthru
      _
    %p380 = scmp.le.s32.totalorder 2, %s10
    // Predicated region
    $region37: #{patch_easre_forward.1} parent=5 // pred_check
      %p381 = pneg %p380
    $region38: #{patch_easre_forward.1} parent=5 // pred_check_branch
      %383 = sbr.rel (%p381) target = $region40
    $region39: #{patch_easre_forward.1} parent=5 // pred_region
      %s384 = ssub.s32 %s10, 2
      // Predicated region
      $region41: #{patch_easre_forward.1} parent=39 // pred_check
        %p385 = pneg %p91
      $region42: #{patch_easre_forward.1} parent=39 // pred_check_branch
        %387 = sbr.rel (%p385) target = $region44
      $region43: #{patch_easre_forward.1} parent=39 // pred_region
        %p388 = scmp.lt.s32.totalorder %s16, 1
        %s389 = scalar_select %p388, %s16, 1
        %s390 = scalar_lea.vmem %s2, %s389
      $region44: #{patch_easre_forward.1} parent=39 // pred_fallthru
        _
      // Predicated region
      $region45: #{patch_easre_forward.1} parent=39 // pred_check
        %p391 = pneg %p117
      $region46: #{patch_easre_forward.1} parent=39 // pred_check_branch
        %393 = sbr.rel (%p391) target = $region48
      $region47: #{patch_easre_forward.1} parent=39 // pred_region
        %p394 = scmp.lt.s32.totalorder %s16, 1
        %s395 = scalar_select %p394, %s16, 1
        %s396 = scalar_lea.vmem %s3, %s395
      $region48: #{patch_easre_forward.1} parent=39 // pred_fallthru
        _
    $region40: #{patch_easre_forward.1} parent=5 // pred_fallthru
      _
  $region6: #{patch_easre_forward.1} parent=0 // loop_footer
    %s14 = sadd.s32 1, %s10
  $region7: #{patch_easre_forward.1} parent=0 // loop_footer_branch
    %9 = sbr.rel target = $region3
  $region8: #{patch_easre_forward.1} parent=0 // loop_exit
    _

// kernel: mul.1
$region0: #{mul.1}
  #allocation2 [shape = 's32[1]{0}', space=sflag, size = 0x4, scoped, tag = 'scoped memory for mul.1']
  %s0 = inlined_call_operand.vmem [shape: f32[2,4,16,16], index: 0, kind: input, shape index: {}]
  %s1 = inlined_call_operand.vmem [shape: f32[2,4,16,16], index: 1, kind: input, shape index: {}]
  %s2 = inlined_call_operand.hbm [shape: f32[2,4,16,16], index: 2, kind: output, shape index: {}]
  $region1: #{mul.1} parent=0
    #allocation0 [shape = 'u8[65536]{0}', space=vmem, size = 0x10000, scoped, tag = 'operand span for operand 2']
    #allocation1 [shape = 's32[1]{0}', space=sflag, size = 0x4, scoped, tag = 'scoped memory for mul.1']
    %3 = vsyncpa [#allocation1], 0
    %v4 = vld [vmem:[%s0] sm:$0xff]
    %v5 = vld [vmem:[%s1] sm:$0xff]
    %6 = xla_tuple %v4, %v5
    %7 = xla_tuple %6
    %v8 = vmul.f32 %v4, %v5
    %9 = xla_tuple %v8
    %10 = vst [vmem:[#allocation0] sm:$0xff] %v8
    %s11 = scalar_lea.vmem %s0, 64
    %v12 = vld [vmem:[%s11] sm:$0xff]
    %s13 = scalar_lea.vmem %s1, 64
    %v14 = vld [vmem:[%s13] sm:$0xff]
    %15 = xla_tuple %v12, %v14
    %16 = xla_tuple %15
    %v17 = vmul.f32 %v12, %v14
    %18 = xla_tuple %v17
    %s19 = scalar_lea.vmem [#allocation0], 64
    %20 = vst [vmem:[%s19] sm:$0xff] %v17
    %s21 = scalar_lea.vmem %s0, 16
    %v22 = vld [vmem:[%s21] sm:$0xff]
    %s23 = scalar_lea.vmem %s1, 16
    %v24 = vld [vmem:[%s23] sm:$0xff]
    %25 = xla_tuple %v22, %v24
    %26 = xla_tuple %25
    %v27 = vmul.f32 %v22, %v24
    %28 = xla_tuple %v27
    %s29 = scalar_lea.vmem [#allocation0], 16
    %30 = vst [vmem:[%s29] sm:$0xff] %v27
    %s31 = scalar_lea.vmem %s0, 80
    %v32 = vld [vmem:[%s31] sm:$0xff]
    %s33 = scalar_lea.vmem %s1, 80
    %v34 = vld [vmem:[%s33] sm:$0xff]
    %35 = xla_tuple %v32, %v34
    %36 = xla_tuple %35
    %v37 = vmul.f32 %v32, %v34
    %38 = xla_tuple %v37
    %s39 = scalar_lea.vmem [#allocation0], 80
    %40 = vst [vmem:[%s39] sm:$0xff] %v37
    %s41 = scalar_lea.vmem %s0, 32
    %v42 = vld [vmem:[%s41] sm:$0xff]
    %s43 = scalar_lea.vmem %s1, 32
    %v44 = vld [vmem:[%s43] sm:$0xff]
    %45 = xla_tuple %v42, %v44
    %46 = xla_tuple %45
    %v47 = vmul.f32 %v42, %v44
    %48 = xla_tuple %v47
    %s49 = scalar_lea.vmem [#allocation0], 32
    %50 = vst [vmem:[%s49] sm:$0xff] %v47
    %s51 = scalar_lea.vmem %s0, 96
    %v52 = vld [vmem:[%s51] sm:$0xff]
    %s53 = scalar_lea.vmem %s1, 96
    %v54 = vld [vmem:[%s53] sm:$0xff]
    %55 = xla_tuple %v52, %v54
    %56 = xla_tuple %55
    %v57 = vmul.f32 %v52, %v54
    %58 = xla_tuple %v57
    %s59 = scalar_lea.vmem [#allocation0], 96
    %60 = vst [vmem:[%s59] sm:$0xff] %v57
    %s61 = scalar_lea.vmem %s0, 48
    %v62 = vld [vmem:[%s61] sm:$0xff]
    %s63 = scalar_lea.vmem %s1, 48
    %v64 = vld [vmem:[%s63] sm:$0xff]
    %65 = xla_tuple %v62, %v64
    %66 = xla_tuple %65
    %v67 = vmul.f32 %v62, %v64
    %68 = xla_tuple %v67
    %s69 = scalar_lea.vmem [#allocation0], 48
    %70 = vst [vmem:[%s69] sm:$0xff] %v67
    %s71 = scalar_lea.vmem %s0, 112
    %v72 = vld [vmem:[%s71] sm:$0xff]
    %s73 = scalar_lea.vmem %s1, 112
    %v74 = vld [vmem:[%s73] sm:$0xff]
    %75 = xla_tuple %v72, %v74
    %76 = xla_tuple %75
    %v77 = vmul.f32 %v72, %v74
    %78 = xla_tuple %v77
    %s79 = scalar_lea.vmem [#allocation0], 112
    %80 = vst [vmem:[%s79] sm:$0xff] %v77
    %s81 = scalar_lea.vmem %s0, 8
    %v82 = vld [vmem:[%s81] sm:$0xff]
    %s83 = scalar_lea.vmem %s1, 8
    %v84 = vld [vmem:[%s83] sm:$0xff]
    %85 = xla_tuple %v82, %v84
    %86 = xla_tuple %85
    %v87 = vmul.f32 %v82, %v84
    %88 = xla_tuple %v87
    %s89 = scalar_lea.vmem [#allocation0], 8
    %90 = vst [vmem:[%s89] sm:$0xff] %v87
    %s91 = scalar_lea.vmem %s0, 72
    %v92 = vld [vmem:[%s91] sm:$0xff]
    %s93 = scalar_lea.vmem %s1, 72
    %v94 = vld [vmem:[%s93] sm:$0xff]
    %95 = xla_tuple %v92, %v94
    %96 = xla_tuple %95
    %v97 = vmul.f32 %v92, %v94
    %98 = xla_tuple %v97
    %s99 = scalar_lea.vmem [#allocation0], 72
    %100 = vst [vmem:[%s99] sm:$0xff] %v97
    %s101 = scalar_lea.vmem %s0, 24
    %v102 = vld [vmem:[%s101] sm:$0xff]
    %s103 = scalar_lea.vmem %s1, 24
    %v104 = vld [vmem:[%s103] sm:$0xff]
    %105 = xla_tuple %v102, %v104
    %106 = xla_tuple %105
    %v107 = vmul.f32 %v102, %v104
    %108 = xla_tuple %v107
    %s109 = scalar_lea.vmem [#allocation0], 24
    %110 = vst [vmem:[%s109] sm:$0xff] %v107
    %s111 = scalar_lea.vmem %s0, 88
    %v112 = vld [vmem:[%s111] sm:$0xff]
    %s113 = scalar_lea.vmem %s1, 88
    %v114 = vld [vmem:[%s113] sm:$0xff]
    %115 = xla_tuple %v112, %v114
    %116 = xla_tuple %115
    %v117 = vmul.f32 %v112, %v114
    %118 = xla_tuple %v117
    %s119 = scalar_lea.vmem [#allocation0], 88
    %120 = vst [vmem:[%s119] sm:$0xff] %v117
    %s121 = scalar_lea.vmem %s0, 40
    %v122 = vld [vmem:[%s121] sm:$0xff]
    %s123 = scalar_lea.vmem %s1, 40
    %v124 = vld [vmem:[%s123] sm:$0xff]
    %125 = xla_tuple %v122, %v124
    %126 = xla_tuple %125
    %v127 = vmul.f32 %v122, %v124
    %128 = xla_tuple %v127
    %s129 = scalar_lea.vmem [#allocation0], 40
    %130 = vst [vmem:[%s129] sm:$0xff] %v127
    %s131 = scalar_lea.vmem %s0, 104
    %v132 = vld [vmem:[%s131] sm:$0xff]
    %s133 = scalar_lea.vmem %s1, 104
    %v134 = vld [vmem:[%s133] sm:$0xff]
    %135 = xla_tuple %v132, %v134
    %136 = xla_tuple %135
    %v137 = vmul.f32 %v132, %v134
    %138 = xla_tuple %v137
    %s139 = scalar_lea.vmem [#allocation0], 104
    %140 = vst [vmem:[%s139] sm:$0xff] %v137
    %s141 = scalar_lea.vmem %s0, 56
    %v142 = vld [vmem:[%s141] sm:$0xff]
    %s143 = scalar_lea.vmem %s1, 56
    %v144 = vld [vmem:[%s143] sm:$0xff]
    %145 = xla_tuple %v142, %v144
    %146 = xla_tuple %145
    %v147 = vmul.f32 %v142, %v144
    %148 = xla_tuple %v147
    %s149 = scalar_lea.vmem [#allocation0], 56
    %150 = vst [vmem:[%s149] sm:$0xff] %v147
    %s151 = scalar_lea.vmem %s0, 120
    %v152 = vld [vmem:[%s151] sm:$0xff]
    %s153 = scalar_lea.vmem %s1, 120
    %v154 = vld [vmem:[%s153] sm:$0xff]
    %155 = xla_tuple %v152, %v154
    %156 = xla_tuple %155
    %v157 = vmul.f32 %v152, %v154
    %158 = xla_tuple %v157
    %s159 = scalar_lea.vmem [#allocation0], 120
    %160 = vst [vmem:[%s159] sm:$0xff] %v157
    %s162 = ssub.s32 2048, 2048
    %163 = vsyncadd [#allocation1], %s162
    %s164 = sshll.u32 [#allocation0], 4
    %s165 = int_to_ptr.vmem [resolvable:$true] %s164
    %170 = dma.vmem_to_hbm [thread:$0]  %s165, 2048, %s2, [#allocation1], 128, 128, 8
    %171 = dma.done [#allocation1], 2048
    %172 = vsyncpa [#allocation1], 1

</llo_original>
